<compile_context>
chip_gen: v7x
topology: tpu7x:2x2x1
jax: 0.10.0
libtpu: 0.0.40
codegen_flags: <defaults>
</compile_context>

<pallas_src>
import functools
import math

import jax
import jax.numpy as jnp
from jax import lax
from jax.experimental import pallas as pl
from jax.experimental.pallas import tpu as pltpu


def _sq_diff_sum_kernel(x_ref, out_ref, carry_ref, *, N, C, F, ragged):
    """Accumulates per-batch sum of squared first differences over lane chunks."""
    j = pl.program_id(0)

    @pl.when(j == 0)
    def _():
        out_ref[...] = jnp.zeros_like(out_ref)

    x = x_ref[...].astype(jnp.float32)                     # (B, C)

    # Within-chunk diffs: rolled[:, l] = x[:, l - F] (lane roll, XLU slot).
    rolled = pltpu.roll(x, shift=F % C, axis=1)
    d = x - rolled
    sq = d * d

    # Lanes l < F pair with the previous chunk (handled via the carry below);
    # on the ragged last chunk, lanes beyond N are padding.  Mask them out.
    lane = lax.broadcasted_iota(jnp.int32, sq.shape, 1)
    valid = lane >= F
    if ragged:
        valid = valid & (lane < (N - j * C))
    sq = jnp.where(valid, sq, 0.0)
    partial = jnp.sum(sq, axis=1, keepdims=True)           # (B, 1)

    # Chunk-boundary diffs: predecessors of the first F columns are the last F
    # columns of the previous chunk, which is exactly rolled[:, :F] there and
    # is kept in `carry_ref`.
    x_head = x[:, 0:F]                                      # (B, F), lane-0 aligned
    d0 = x_head - carry_ref[...]
    valid0 = j > 0
    if ragged:
        lane0 = lax.broadcasted_iota(jnp.int32, d0.shape, 1)
        valid0 = valid0 & (lane0 < (N - j * C))
    d0 = jnp.where(valid0, d0, 0.0)
    partial = partial + jnp.sum(d0 * d0, axis=1, keepdims=True)

    # Carry this chunk's last F columns forward (aligned (B, F) store).
    carry_ref[...] = rolled[:, 0:F]

    out_ref[...] += partial


def _choose_block_cols(N, B, F, itemsize, block_cols=None, target_bytes=2 << 20):
    """Lane-chunk width: multiple of 128, >= F, ~target_bytes per block."""
    if block_cols is not None:
        c = int(block_cols)
    else:
        c = int(target_bytes) // max(B * int(itemsize), 1)
    c = max(c, F, 128)
    c = ((c + 127) // 128) * 128
    if c >= N:
        return N                                            # single full-extent block
    return c


def sharpe_ratio_loss(pred, true, risk_free_rate=0.0, eps=1e-8,
                      block_cols=None, target_block_bytes=2 << 20):
    if pred.shape != true.shape:
        raise ValueError(f"Shape mismatch: pred {pred.shape}, true {true.shape}")
    if pred.ndim < 2 or pred.shape[1] < 2:
        raise ValueError("pred must have shape (batch, time >= 2, ...)")
    # NOTE: `true` is only shape-checked by the reference module, never read.

    B, S = int(pred.shape[0]), int(pred.shape[1])
    F = int(math.prod(pred.shape[2:]))                      # 1 for 2-D inputs
    N = S * F
    x = pred.reshape(B, N)                                   # contiguous: free reshape

    C = _choose_block_cols(N, B, F, pred.dtype.itemsize, block_cols,
                           target_block_bytes)
    nc = pl.cdiv(N, C)
    ragged = (N % C) != 0

    kernel = functools.partial(_sq_diff_sum_kernel, N=N, C=C, F=F, ragged=ragged)

    sq_parts = pl.pallas_call(
        kernel,
        out_shape=jax.ShapeDtypeStruct((B, 1), jnp.float32),
        grid_spec=pltpu.PrefetchScalarGridSpec(
            num_scalar_prefetch=0,
            grid=(nc,),
            in_specs=[pl.BlockSpec((B, C), lambda j: (0, j))],
            out_specs=pl.BlockSpec((B, 1), lambda j: (0, 0)),
            scratch_shapes=[pltpu.VMEM((B, F), jnp.float32)],   # boundary carry
        ),
        # Sequential: the carry and the resident output block flow across the
        # chunk axis.
        # TODO(synk): on v7x, split the batch into per-core groups (extra grid
        # axis marked "parallel") to use both TensorCores when B is large.
        compiler_params=pltpu.CompilerParams(
            dimension_semantics=("arbitrary",),
            vmem_limit_bytes=32 * 1024 * 1024),
    )(x)

    n = B * (S - 1) * F
    sum_sq = jnp.sum(sq_parts)

    # Telescoped sum of first differences: sum_t(pred[t] - pred[t-1]) = last - first.
    total = jnp.sum(pred[:, -1].astype(jnp.float32) - pred[:, 0].astype(jnp.float32))
    mean = total / n

    # One-pass unbiased variance; fine for near-zero-mean return series.
    # TODO(synk): use shifted/compensated accumulation if inputs can carry a
    # large DC offset or n grows past f32 accumulation limits.
    var = jnp.maximum((sum_sq - n * mean * mean) / (n - 1), 0.0)
    std = jnp.sqrt(var)
    sharpe = (mean - risk_free_rate) / (std + eps)
    return -sharpe


def sharpe_ratio_loss_ref(pred, true, risk_free_rate=0.0, eps=1e-8):
    if pred.shape != true.shape:
        raise ValueError(f"Shape mismatch: pred {pred.shape}, true {true.shape}")
    r = pred[:, 1:] - pred[:, :-1]
    mean = jnp.mean(r)
    std = jnp.std(r, ddof=1)                                 # unbiased, like torch.std
    return -((mean - risk_free_rate) / (std + eps))


if __name__ == "__main__":
    key = jax.random.PRNGKey(0)
    k1, k2, k3, k4, k5, k6 = jax.random.split(key, 6)

    # Case 1: (batch, time, features); fits in a single lane chunk.
    shape1 = (2, 64, 32)
    pred1 = jax.random.normal(k1, shape1, dtype=jnp.float32)
    true1 = jax.random.normal(k2, shape1, dtype=jnp.float32)
    out1 = jax.block_until_ready(sharpe_ratio_loss(pred1, true1))
    ref1 = jax.block_until_ready(sharpe_ratio_loss_ref(pred1, true1))
    assert jnp.allclose(out1, ref1, rtol=2e-4, atol=1e-5), (out1, ref1)

    # Case 2: 3-D with forced small chunks -> multi-chunk, ragged tail, carry.
    shape2 = (2, 50, 24)
    pred2 = jax.random.normal(k3, shape2, dtype=jnp.float32)
    true2 = jax.random.normal(k4, shape2, dtype=jnp.float32)
    out2 = jax.block_until_ready(sharpe_ratio_loss(pred2, true2, block_cols=512))
    ref2 = jax.block_until_ready(sharpe_ratio_loss_ref(pred2, true2))
    assert jnp.allclose(out2, ref2, rtol=2e-4, atol=1e-5), (out2, ref2)

    # Case 3: plain 2-D (batch, time) input (F == 1), lane-packed path,
    # multi-chunk + ragged last chunk.
    shape3 = (4, 300)
    pred3 = jax.random.normal(k5, shape3, dtype=jnp.float32)
    true3 = jax.random.normal(k6, shape3, dtype=jnp.float32)
    out3 = jax.block_until_ready(sharpe_ratio_loss(pred3, true3, block_cols=128))
    ref3 = jax.block_until_ready(sharpe_ratio_loss_ref(pred3, true3))
    assert jnp.allclose(out3, ref3, rtol=2e-4, atol=1e-5), (out3, ref3)

    print("KERNEL_OK")
</pallas_src>

<mosaic_0001>
module attributes {stable_mosaic.version = 11 : i64} {
  func.func @_sq_diff_sum_kernel(%arg0: i32, %arg1: memref<2x2048xf32, #tpu.memory_space<vmem>>, %arg2: memref<2x1xf32, #tpu.memory_space<vmem>>, %arg3: memref<2x32xf32, #tpu.memory_space<vmem>>) attributes {dimension_semantics = [#tpu.dimension_semantics<arbitrary>], iteration_bounds = array<i64: 1>, scalar_prefetch = 0 : i64, scratch_operands = 1 : i64, tpu.core_type = #tpu.core_type<tc>, window_params = [{transform_indices = @transform_0, window_bounds = array<i64: 2, 2048>}, {pipeline_mode = #tpu.pipeline_mode<synchronous>, transform_indices = @transform_1, window_bounds = array<i64: 2, 1>}]} {
    %c0_i32 = arith.constant 0 : i32
    %0 = arith.cmpi eq, %arg0, %c0_i32 : i32
    %1 = arith.extui %0 : i1 to i32
    %c0_i32_0 = arith.constant 0 : i32
    %2 = arith.cmpi ne, %1, %c0_i32_0 : i32
    scf.if %2 {
      %cst_15 = arith.constant 0.000000e+00 : f32
      %29 = vector.broadcast %cst_15 : f32 to vector<2x1xf32>
      %c0_16 = arith.constant 0 : index
      %c0_17 = arith.constant 0 : index
      %30 = vector.load %arg2[%c0_16, %c0_17] : memref<2x1xf32, #tpu.memory_space<vmem>>, vector<2x1xf32>
      tpu.vector_store %arg2[%c0_16, %c0_17], %29 {strides = array<i32>} : memref<2x1xf32, #tpu.memory_space<vmem>>, vector<2x1xf32>,
    } else {
    }
    %c0 = arith.constant 0 : index
    %c0_1 = arith.constant 0 : index
    %3 = vector.load %arg1[%c0, %c0_1] : memref<2x2048xf32, #tpu.memory_space<vmem>>, vector<2x2048xf32>
    %c32_i32 = arith.constant 32 : i32
    %4 = tpu.dynamic_rotate %3 by %c32_i32 dim 1 : vector<2x2048xf32>, i32 -> vector<2x2048xf32>
    %5 = arith.subf %3, %4 : vector<2x2048xf32>
    %6 = arith.mulf %5, %5 : vector<2x2048xf32>
    %7 = tpu.iota {dimensions = array<i32: 1>} : vector<2x2048xi32>
    %c32_i32_2 = arith.constant 32 : i32
    %8 = vector.broadcast %c32_i32_2 : i32 to vector<2x2048xi32>
    %9 = arith.cmpi sge, %7, %8 : vector<2x2048xi32>
    %cst = arith.constant 0.000000e+00 : f32
    %10 = vector.broadcast %cst : f32 to vector<2x2048xf32>
    %11 = arith.select %9, %6, %10 : vector<2x2048xi1>, vector<2x2048xf32>
    %cst_3 = arith.constant dense<0.000000e+00> : vector<2xf32>
    %12 = vector.multi_reduction <add>, %11, %cst_3 [1] : vector<2x2048xf32> to vector<2xf32>
    %13 = vector.shape_cast %12 : vector<2xf32> to vector<2x1xf32>
    %14 = vector.extract_strided_slice %3 {offsets = [0, 0], sizes = [2, 32], strides = [1, 1]} : vector<2x2048xf32> to vector<2x32xf32>
    %c0_4 = arith.constant 0 : index
    %c0_5 = arith.constant 0 : index
    %15 = vector.load %arg3[%c0_4, %c0_5] : memref<2x32xf32, #tpu.memory_space<vmem>>, vector<2x32xf32>
    %16 = arith.subf %14, %15 : vector<2x32xf32>
    %c0_i32_6 = arith.constant 0 : i32
    %17 = arith.cmpi sgt, %arg0, %c0_i32_6 : i32
    %cst_7 = arith.constant 0.000000e+00 : f32
    %18 = vector.broadcast %cst_7 : f32 to vector<2x32xf32>
    %19 = arith.select %17, %16, %18 : vector<2x32xf32>
    %20 = arith.mulf %19, %19 : vector<2x32xf32>
    %cst_8 = arith.constant dense<0.000000e+00> : vector<2xf32>
    %21 = vector.multi_reduction <add>, %20, %cst_8 [1] : vector<2x32xf32> to vector<2xf32>
    %22 = vector.shape_cast %21 : vector<2xf32> to vector<2x1xf32>
    %23 = arith.addf %13, %22 : vector<2x1xf32>
    %24 = vector.extract_strided_slice %4 {offsets = [0, 0], sizes = [2, 32], strides = [1, 1]} : vector<2x2048xf32> to vector<2x32xf32>
    %c0_9 = arith.constant 0 : index
    %c0_10 = arith.constant 0 : index
    %25 = vector.load %arg3[%c0_9, %c0_10] : memref<2x32xf32, #tpu.memory_space<vmem>>, vector<2x32xf32>
    tpu.vector_store %arg3[%c0_9, %c0_10], %24 {strides = array<i32>} : memref<2x32xf32, #tpu.memory_space<vmem>>, vector<2x32xf32>,
    %c0_11 = arith.constant 0 : index
    %c0_12 = arith.constant 0 : index
    %26 = vector.load %arg2[%c0_11, %c0_12] : memref<2x1xf32, #tpu.memory_space<vmem>>, vector<2x1xf32>
    %27 = arith.addf %26, %23 : vector<2x1xf32>
    %c0_13 = arith.constant 0 : index
    %c0_14 = arith.constant 0 : index
    %28 = vector.load %arg2[%c0_13, %c0_14] : memref<2x1xf32, #tpu.memory_space<vmem>>, vector<2x1xf32>
    tpu.vector_store %arg2[%c0_13, %c0_14], %27 {strides = array<i32>} : memref<2x1xf32, #tpu.memory_space<vmem>>, vector<2x1xf32>,
    return
  }
  func.func @transform_0(%arg0: i32) -> (i32, i32) {
    %c0_i32 = arith.constant 0 : i32
    %c0_i32_0 = arith.constant 0 : i32
    return %c0_i32, %arg0 : i32, i32
  }
  func.func @transform_1(%arg0: i32) -> (i32, i32) {
    %c0_i32 = arith.constant 0 : i32
    %c0_i32_0 = arith.constant 0 : i32
    %c0_i32_1 = arith.constant 0 : i32
    return %c0_i32, %c0_i32_0 : i32, i32
  }
}

</mosaic_0001>

<llo_original>
// kernel: tpu_custom_call.1
$region0: #{tpu_custom_call.1}
  #allocation0 [shape = 'u32[]', space=smem, size = 0x4, offset = 0x4, fixed_abs, tag = 'smem constant byte address 0x4 - core index']
  #allocation1 [shape = 'u32[144,128]{1,0:T(1,128)}', space=vmem, size = 0x12000, scoped, tag = 'internal scratch']
  #allocation2 [shape = 'f32[2,32]{1,0:T(2,128)}', space=vmem, size = 0x400, scoped, tag = 'scratch operand']
  %s0 = inlined_call_operand.hbm [shape: f32[2,2048], index: 0, kind: input, shape index: {}]
  %s1 = inlined_call_operand.vmem [shape: f32[2,1], index: 1, kind: output, shape index: {}]
  %s2 = sld [smem:[#allocation0]]
  $region22: #{tpu_custom_call.1} parent=0
    _
  %s4 = ssub.s32 1, %s2
  %s5 = scalar_select 0, %s4, %s2
  $region1: #{tpu_custom_call.1} parent=0
    #allocation3 [shape = 'u8[16384]{0}', space=vmem, size = 0x4000, scoped, tag = 'input window, operand 0, single buffered']
    #allocation4 [shape = 's32[1]{0}', space=sflag, size = 0x4, scoped, tag = 'scoped memory for tpu_custom_call.1']
    %6 = vsyncpa [#allocation4], 0
    // Predicated region
    $region2: #{tpu_custom_call.1} parent=1 // pred_check
      _
    $region3: #{tpu_custom_call.1} parent=1 // pred_check_branch
      %8 = sbr.rel (0) target = $region5
    $region4: #{tpu_custom_call.1} parent=1 // pred_region
      %s10 = ssub.s32 512, 512
      %11 = vsyncadd [#allocation4], %s10
      %s13 = sshll.u32 [#allocation3], 4
      %s14 = int_to_ptr.vmem [resolvable:$true] %s13
      %16 = dma.hbm_to_vmem [thread:$0]  %s0, 512, %s14, [#allocation4]
    $region5: #{tpu_custom_call.1} parent=1 // pred_fallthru
      _
    // Predicated region
    $region6: #{tpu_custom_call.1} parent=1 // pred_check
      _
    $region7: #{tpu_custom_call.1} parent=1 // pred_check_branch
      %18 = sbr.rel (0) target = $region9
    $region8: #{tpu_custom_call.1} parent=1 // pred_region
      %19 = dma.done [#allocation4], 512
    $region9: #{tpu_custom_call.1} parent=1 // pred_fallthru
      _
    %p20 = scmp.eq.s32.totalorder 0, 0
    // Predicated region
    $region10: #{tpu_custom_call.1} parent=1 // pred_check
      %p21 = pneg %p20
    $region11: #{tpu_custom_call.1} parent=1 // pred_check_branch
      %23 = sbr.rel (%p21) target = $region13
    $region12: #{tpu_custom_call.1} parent=1 // pred_region
      %vm24 = vcmask 1024
      %25 = vst.msk [vmem:[%s1] sm:$0x3] %vm24, 0.0
    $region13: #{tpu_custom_call.1} parent=1 // pred_fallthru
      _
    %v26 = vld [vmem:[#allocation3] sm:$0xff]
    %v27 = vld [vmem:[#allocation3 + $0x8] sm:$0xff]
    %v28 = vld [vmem:[#allocation3 + $0x10] sm:$0xff]
    %v29 = vld [vmem:[#allocation3 + $0x18] sm:$0xff]
    %v34 = vcombine.high %v26, %v26
    %v36 = vunpack.c.l.s4 1983009808
    %v37 = vunpack.c.0.s8 %v36
    %v38 = vlaneseq
    %v39 = vshrl.u32 %v38, 7
    %v40 = vsub.s32 %v37, %v39
    %v41 = vrot.slane %v26, %v40
    %v43 = vunpack.c.l.s4 1983009808
    %v44 = vunpack.c.0.s8 %v43
    %v45 = vlaneseq
    %v46 = vshrl.u32 %v45, 7
    %v47 = vsub.s32 %v44, %v46
    %v48 = vrot.slane %v34, %v47
    %v49 = vcombine.high %v41, %v41
    %v50 = vcombine.high %v48, %v48
    %v51 = vcombine.high %v27, %v27
    %v53 = vunpack.c.l.s4 1983009808
    %v54 = vunpack.c.0.s8 %v53
    %v55 = vlaneseq
    %v56 = vshrl.u32 %v55, 7
    %v57 = vsub.s32 %v54, %v56
    %v58 = vrot.slane %v27, %v57
    %v60 = vunpack.c.l.s4 1983009808
    %v61 = vunpack.c.0.s8 %v60
    %v62 = vlaneseq
    %v63 = vshrl.u32 %v62, 7
    %v64 = vsub.s32 %v61, %v63
    %v65 = vrot.slane %v51, %v64
    %v66 = vcombine.high %v58, %v58
    %v67 = vcombine.high %v65, %v65
    %v68 = vcombine.high %v28, %v28
    %v70 = vunpack.c.l.s4 1983009808
    %v71 = vunpack.c.0.s8 %v70
    %v72 = vlaneseq
    %v73 = vshrl.u32 %v72, 7
    %v74 = vsub.s32 %v71, %v73
    %v75 = vrot.slane %v28, %v74
    %v77 = vunpack.c.l.s4 1983009808
    %v78 = vunpack.c.0.s8 %v77
    %v79 = vlaneseq
    %v80 = vshrl.u32 %v79, 7
    %v81 = vsub.s32 %v78, %v80
    %v82 = vrot.slane %v68, %v81
    %v83 = vcombine.high %v75, %v75
    %v84 = vcombine.high %v82, %v82
    %v85 = vcombine.high %v29, %v29
    %v87 = vunpack.c.l.s4 1983009808
    %v88 = vunpack.c.0.s8 %v87
    %v89 = vlaneseq
    %v90 = vshrl.u32 %v89, 7
    %v91 = vsub.s32 %v88, %v90
    %v92 = vrot.slane %v29, %v91
    %v94 = vunpack.c.l.s4 1983009808
    %v95 = vunpack.c.0.s8 %v94
    %v96 = vlaneseq
    %v97 = vshrl.u32 %v96, 7
    %v98 = vsub.s32 %v95, %v97
    %v99 = vrot.slane %v85, %v98
    %v100 = vcombine.high %v92, %v92
    %v101 = vcombine.high %v99, %v99
    %118 = vrot.lane.b32.xlu0 %v41, 32
    %v119 = vpop.permute.xlu0 %118
    %120 = vrot.lane.b32.xlu0 %v49, 32
    %v121 = vpop.permute.xlu0 %120
    %122 = vrot.lane.b32.xlu0 %v48, 32
    %v123 = vpop.permute.xlu0 %122
    %124 = vrot.lane.b32.xlu0 %v50, 32
    %v125 = vpop.permute.xlu0 %124
    %126 = vrot.lane.b32.xlu0 %v58, 32
    %v127 = vpop.permute.xlu0 %126
    %128 = vrot.lane.b32.xlu0 %v66, 32
    %v129 = vpop.permute.xlu0 %128
    %130 = vrot.lane.b32.xlu0 %v65, 32
    %v131 = vpop.permute.xlu0 %130
    %132 = vrot.lane.b32.xlu0 %v67, 32
    %v133 = vpop.permute.xlu0 %132
    %134 = vrot.lane.b32.xlu0 %v75, 32
    %v135 = vpop.permute.xlu0 %134
    %136 = vrot.lane.b32.xlu0 %v83, 32
    %v137 = vpop.permute.xlu0 %136
    %138 = vrot.lane.b32.xlu0 %v82, 32
    %v139 = vpop.permute.xlu0 %138
    %140 = vrot.lane.b32.xlu0 %v84, 32
    %v141 = vpop.permute.xlu0 %140
    %142 = vrot.lane.b32.xlu0 %v92, 32
    %v143 = vpop.permute.xlu0 %142
    %144 = vrot.lane.b32.xlu0 %v100, 32
    %v145 = vpop.permute.xlu0 %144
    %146 = vrot.lane.b32.xlu0 %v99, 32
    %v147 = vpop.permute.xlu0 %146
    %148 = vrot.lane.b32.xlu0 %v101, 32
    %v149 = vpop.permute.xlu0 %148
    %v150 = vlaneseq
    %v151 = vand.u32 %v150, 127
    %vm152 = vcmp.lt.s32.totalorder %v151, 32
    %v153 = vsel %vm152, %v147, %v149
    %v154 = vsel %vm152, %v145, %v147
    %v155 = vsel %vm152, %v143, %v145
    %v156 = vsel %vm152, %v141, %v143
    %v157 = vsel %vm152, %v139, %v141
    %v158 = vsel %vm152, %v137, %v139
    %v159 = vsel %vm152, %v135, %v137
    %v160 = vsel %vm152, %v133, %v135
    %v161 = vsel %vm152, %v131, %v133
    %v162 = vsel %vm152, %v129, %v131
    %v163 = vsel %vm152, %v127, %v129
    %v164 = vsel %vm152, %v125, %v127
    %v165 = vsel %vm152, %v123, %v125
    %v166 = vsel %vm152, %v121, %v123
    %v167 = vsel %vm152, %v119, %v121
    %v168 = vsel %vm152, %v149, %v119
    %v185 = vcombine.low %v168, %v167
    %v186 = vcombine.low %v166, %v165
    %v188 = vunpack.c.l.s4 1983009808
    %v189 = vunpack.c.0.s8 %v188
    %v190 = vlaneseq
    %v191 = vshrl.u32 %v190, 7
    %v192 = vsub.s32 %v189, %v191
    %v193 = vrot.slane %v185, %v192
    %v195 = vunpack.c.l.s4 1983009808
    %v196 = vunpack.c.0.s8 %v195
    %v197 = vlaneseq
    %v198 = vshrl.u32 %v197, 7
    %v199 = vsub.s32 %v196, %v198
    %v200 = vrot.slane %v186, %v199
    %v201 = vcombine.low %v193, %v200
    %v202 = vcombine.low %v164, %v163
    %v203 = vcombine.low %v162, %v161
    %v205 = vunpack.c.l.s4 1983009808
    %v206 = vunpack.c.0.s8 %v205
    %v207 = vlaneseq
    %v208 = vshrl.u32 %v207, 7
    %v209 = vsub.s32 %v206, %v208
    %v210 = vrot.slane %v202, %v209
    %v212 = vunpack.c.l.s4 1983009808
    %v213 = vunpack.c.0.s8 %v212
    %v214 = vlaneseq
    %v215 = vshrl.u32 %v214, 7
    %v216 = vsub.s32 %v213, %v215
    %v217 = vrot.slane %v203, %v216
    %v218 = vcombine.low %v210, %v217
    %v219 = vcombine.low %v160, %v159
    %v220 = vcombine.low %v158, %v157
    %v222 = vunpack.c.l.s4 1983009808
    %v223 = vunpack.c.0.s8 %v222
    %v224 = vlaneseq
    %v225 = vshrl.u32 %v224, 7
    %v226 = vsub.s32 %v223, %v225
    %v227 = vrot.slane %v219, %v226
    %v229 = vunpack.c.l.s4 1983009808
    %v230 = vunpack.c.0.s8 %v229
    %v231 = vlaneseq
    %v232 = vshrl.u32 %v231, 7
    %v233 = vsub.s32 %v230, %v232
    %v234 = vrot.slane %v220, %v233
    %v235 = vcombine.low %v227, %v234
    %v236 = vcombine.low %v156, %v155
    %v237 = vcombine.low %v154, %v153
    %v239 = vunpack.c.l.s4 1983009808
    %v240 = vunpack.c.0.s8 %v239
    %v241 = vlaneseq
    %v242 = vshrl.u32 %v241, 7
    %v243 = vsub.s32 %v240, %v242
    %v244 = vrot.slane %v236, %v243
    %v246 = vunpack.c.l.s4 1983009808
    %v247 = vunpack.c.0.s8 %v246
    %v248 = vlaneseq
    %v249 = vshrl.u32 %v248, 7
    %v250 = vsub.s32 %v247, %v249
    %v251 = vrot.slane %v237, %v250
    %v252 = vcombine.low %v244, %v251
    %v257 = vsub.f32 %v26, %v201
    %v258 = vsub.f32 %v27, %v218
    %v259 = vsub.f32 %v28, %v235
    %v260 = vsub.f32 %v29, %v252
    %v261 = vmul.f32 %v257, %v257
    %v262 = vmul.f32 %v258, %v258
    %v263 = vmul.f32 %v259, %v259
    %v264 = vmul.f32 %v260, %v260
    %v265 = vadd.s32 %v151, 128
    %v266 = vadd.s32 %v151, 256
    %v267 = vadd.s32 %v151, 384
    %v268 = vadd.s32 %v151, 512
    %v269 = vadd.s32 %v151, 640
    %v270 = vadd.s32 %v151, 768
    %v271 = vadd.s32 %v151, 896
    %v272 = vadd.s32 %v151, 1024
    %v273 = vadd.s32 %v151, 1152
    %v274 = vadd.s32 %v151, 1280
    %v275 = vadd.s32 %v151, 1408
    %v276 = vadd.s32 %v151, 1536
    %v277 = vadd.s32 %v151, 1664
    %v278 = vadd.s32 %v151, 1792
    %v279 = vadd.s32 %v151, 1920
    %vm280 = vcmp.ge.s32.totalorder %v151, 32
    %vm281 = vcmp.ge.s32.totalorder %v265, 32
    %vm282 = vcmp.ge.s32.totalorder %v266, 32
    %vm283 = vcmp.ge.s32.totalorder %v267, 32
    %vm284 = vcmp.ge.s32.totalorder %v268, 32
    %vm285 = vcmp.ge.s32.totalorder %v269, 32
    %vm286 = vcmp.ge.s32.totalorder %v270, 32
    %vm287 = vcmp.ge.s32.totalorder %v271, 32
    %vm288 = vcmp.ge.s32.totalorder %v272, 32
    %vm289 = vcmp.ge.s32.totalorder %v273, 32
    %vm290 = vcmp.ge.s32.totalorder %v274, 32
    %vm291 = vcmp.ge.s32.totalorder %v275, 32
    %vm292 = vcmp.ge.s32.totalorder %v276, 32
    %vm293 = vcmp.ge.s32.totalorder %v277, 32
    %vm294 = vcmp.ge.s32.totalorder %v278, 32
    %vm295 = vcmp.ge.s32.totalorder %v279, 32
    %v300 = vcombine.high %v261, %v261
    %v302 = vunpack.c.l.s4 1983009808
    %v303 = vunpack.c.0.s8 %v302
    %v304 = vlaneseq
    %v305 = vshrl.u32 %v304, 7
    %v306 = vsub.s32 %v303, %v305
    %v307 = vrot.slane %v261, %v306
    %v309 = vunpack.c.l.s4 1983009808
    %v310 = vunpack.c.0.s8 %v309
    %v311 = vlaneseq
    %v312 = vshrl.u32 %v311, 7
    %v313 = vsub.s32 %v310, %v312
    %v314 = vrot.slane %v300, %v313
    %v315 = vcombine.high %v307, %v307
    %v316 = vcombine.high %v314, %v314
    %v317 = vcombine.high %v262, %v262
    %v319 = vunpack.c.l.s4 1983009808
    %v320 = vunpack.c.0.s8 %v319
    %v321 = vlaneseq
    %v322 = vshrl.u32 %v321, 7
    %v323 = vsub.s32 %v320, %v322
    %v324 = vrot.slane %v262, %v323
    %v326 = vunpack.c.l.s4 1983009808
    %v327 = vunpack.c.0.s8 %v326
    %v328 = vlaneseq
    %v329 = vshrl.u32 %v328, 7
    %v330 = vsub.s32 %v327, %v329
    %v331 = vrot.slane %v317, %v330
    %v332 = vcombine.high %v324, %v324
    %v333 = vcombine.high %v331, %v331
    %v334 = vcombine.high %v263, %v263
    %v336 = vunpack.c.l.s4 1983009808
    %v337 = vunpack.c.0.s8 %v336
    %v338 = vlaneseq
    %v339 = vshrl.u32 %v338, 7
    %v340 = vsub.s32 %v337, %v339
    %v341 = vrot.slane %v263, %v340
    %v343 = vunpack.c.l.s4 1983009808
    %v344 = vunpack.c.0.s8 %v343
    %v345 = vlaneseq
    %v346 = vshrl.u32 %v345, 7
    %v347 = vsub.s32 %v344, %v346
    %v348 = vrot.slane %v334, %v347
    %v349 = vcombine.high %v341, %v341
    %v350 = vcombine.high %v348, %v348
    %v351 = vcombine.high %v264, %v264
    %v353 = vunpack.c.l.s4 1983009808
    %v354 = vunpack.c.0.s8 %v353
    %v355 = vlaneseq
    %v356 = vshrl.u32 %v355, 7
    %v357 = vsub.s32 %v354, %v356
    %v358 = vrot.slane %v264, %v357
    %v360 = vunpack.c.l.s4 1983009808
    %v361 = vunpack.c.0.s8 %v360
    %v362 = vlaneseq
    %v363 = vshrl.u32 %v362, 7
    %v364 = vsub.s32 %v361, %v363
    %v365 = vrot.slane %v351, %v364
    %v366 = vcombine.high %v358, %v358
    %v367 = vcombine.high %v365, %v365
    %v384 = vsel %vm280, %v307, 0.0
    %v385 = vsel %vm281, %v315, 0.0
    %v386 = vsel %vm282, %v314, 0.0
    %v387 = vsel %vm283, %v316, 0.0
    %v388 = vsel %vm284, %v324, 0.0
    %v389 = vsel %vm285, %v332, 0.0
    %v390 = vsel %vm286, %v331, 0.0
    %v391 = vsel %vm287, %v333, 0.0
    %v392 = vsel %vm288, %v341, 0.0
    %v393 = vsel %vm289, %v349, 0.0
    %v394 = vsel %vm290, %v348, 0.0
    %v395 = vsel %vm291, %v350, 0.0
    %v396 = vsel %vm292, %v358, 0.0
    %v397 = vsel %vm293, %v366, 0.0
    %v398 = vsel %vm294, %v365, 0.0
    %v399 = vsel %vm295, %v367, 0.0
    %vm400 = vcmask 1041408
    %v401 = vsel %vm400, %v384, 0.0
    %v402 = vsel %vm400, %v385, 0.0
    %v403 = vadd.f32 %v401, %v402
    %v404 = vsel %vm400, %v386, 0.0
    %v405 = vadd.f32 %v403, %v404
    %v406 = vsel %vm400, %v387, 0.0
    %v407 = vadd.f32 %v405, %v406
    %v408 = vsel %vm400, %v388, 0.0
    %v409 = vadd.f32 %v407, %v408
    %v410 = vsel %vm400, %v389, 0.0
    %v411 = vadd.f32 %v409, %v410
    %v412 = vsel %vm400, %v390, 0.0
    %v413 = vadd.f32 %v411, %v412
    %v414 = vsel %vm400, %v391, 0.0
    %v415 = vadd.f32 %v413, %v414
    %v416 = vsel %vm400, %v392, 0.0
    %v417 = vadd.f32 %v415, %v416
    %v418 = vsel %vm400, %v393, 0.0
    %v419 = vadd.f32 %v417, %v418
    %v420 = vsel %vm400, %v394, 0.0
    %v421 = vadd.f32 %v419, %v420
    %v422 = vsel %vm400, %v395, 0.0
    %v423 = vadd.f32 %v421, %v422
    %v424 = vsel %vm400, %v396, 0.0
    %v425 = vadd.f32 %v423, %v424
    %v426 = vsel %vm400, %v397, 0.0
    %v427 = vadd.f32 %v425, %v426
    %v428 = vsel %vm400, %v398, 0.0
    %v429 = vadd.f32 %v427, %v428
    %v430 = vsel %vm400, %v399, 0.0
    %v431 = vadd.f32 %v429, %v430
    %432 = vadd.xlane.f32.xlu0 %v431
    %v433 = vpop.xlane.xlu0 %432
    %v434 = vld [vmem:[#allocation2] sm:$0x3]
    %v435 = vsub.f32 %v26, %v434
    %p436 = scmp.gt.s32.totalorder 0, 0
    %s437 = scalar_select %p436, 1, 0
    %v438 = vstv %s437
    %vm439 = vcmp.eq.s32.totalorder %v438, 1
    %v440 = vsel %vm439, %v435, 0.0
    %v441 = vmul.f32 %v440, %v440
    %vm442 = vcmask 254976
    %v443 = vsel %vm442, %v441, 0.0
    %444 = vadd.xlane.f32.xlu0 %v443
    %v445 = vpop.xlane.xlu0 %444
    %v446 = vadd.f32 %v433, %v445
    %447 = vst.msk [vmem:[#allocation2] sm:$0x3] %vm442, %v168
    %v448 = vld [vmem:[%s1] sm:$0x3]
    %v449 = vadd.f32 %v448, %v446
    %vm450 = vcmask 1024
    %451 = vst.msk [vmem:[%s1] sm:$0x3] %vm450, %v449
    // Predicated region
    $region14: #{tpu_custom_call.1} parent=1 // pred_check
      _
    $region15: #{tpu_custom_call.1} parent=1 // pred_check_branch
      %453 = sbr.rel (0) target = $region17
    $region16: #{tpu_custom_call.1} parent=1 // pred_region
      _
    $region17: #{tpu_custom_call.1} parent=1 // pred_fallthru
      _
    // Predicated region
    $region18: #{tpu_custom_call.1} parent=1 // pred_check
      _
    $region19: #{tpu_custom_call.1} parent=1 // pred_check_branch
      %455 = sbr.rel (0) target = $region21
    $region20: #{tpu_custom_call.1} parent=1 // pred_region
      _
    $region21: #{tpu_custom_call.1} parent=1 // pred_fallthru
      _
    %456 = vsyncpa [#allocation4], 1

</llo_original>
